<compile_context>
chip_gen: v5e
topology: v5e:2x2
jax: 0.10.0
libtpu: 0.0.40
codegen_flags: <defaults>
</compile_context>

<pallas_src>
import functools
import math

import jax
import jax.numpy as jnp
from jax.experimental import pallas as pl
from jax.experimental.pallas import tpu as pltpu

OMEGA = 10.0
EPSILON = 2.0
_C = OMEGA - OMEGA * math.log(1.0 + OMEGA / EPSILON)

_LANE = 128            # lane width (last dim)
_TILE_BYTES = 1 << 20  # ~1 MiB per input tile (per pipeline buffer)


def _tensorcores_per_chip() -> int:
    """Best-effort TensorCores-per-device count (2 on megacore/v7x chips).

    Falls back to 1 (always correct, possibly sub-optimal on dual-TC chips).
    """
    try:
        dev = jax.devices()[0]
    except Exception:
        return 1
    n = getattr(dev, "num_cores", None)
    if isinstance(n, int) and n >= 1:
        return max(1, min(int(n), 2))
    kind = str(getattr(dev, "device_kind", "")).lower()
    if ("v7" in kind) or ("v5p" in kind) or ("v4" in kind):
        return 2
    return 1


def _wing_loss_kernel(pred_ref, targ_ref, acc_ref, *, bpc, br, full_blocks,
                      numel, has_partial):
    c = pl.program_id(0)   # partial-sum / core index   ("parallel")
    i = pl.program_id(1)   # row-block index per core   ("arbitrary")

    @pl.when(i == 0)
    def _():
        acc_ref[...] = jnp.zeros_like(acc_ref)

    p = pred_ref[...].astype(jnp.float32)
    t = targ_ref[...].astype(jnp.float32)
    d = jnp.abs(t - p)
    loss = jnp.where(d < OMEGA, OMEGA * jnp.log1p(d * (1.0 / EPSILON)), d - _C)

    blk = c * bpc + i  # logical block index

    def accumulate(x):
        # Tree-reduce the (br,128) tile down to one (8,128) vreg group with
        # plain VPU adds (sublane-tile-aligned reshape is layout-free), then do
        # a single small accumulator RMW instead of a full-width one.
        acc_ref[...] += x.reshape(br // 8, 8, _LANE).sum(axis=0)

    if not has_partial:
        # Every logical block is fully in-range: no masking anywhere.
        accumulate(loss)
    else:
        @pl.when(blk < full_blocks)
        def _():           # fast path: block fully inside the real data
            accumulate(loss)

        @pl.when(blk >= full_blocks)
        def _():           # slow path: ragged / padded / clamped-duplicate block
            row = jax.lax.broadcasted_iota(jnp.int32, (br, _LANE), 0)
            lane = jax.lax.broadcasted_iota(jnp.int32, (br, _LANE), 1)
            flat = blk * (br * _LANE) + row * _LANE + lane
            accumulate(jnp.where(flat < numel, loss, 0.0))


def wing_loss(pred: jax.Array, target: jax.Array) -> jax.Array:
    assert pred.shape == target.shape, "pred/target must have identical shapes"
    target = target.astype(pred.dtype)
    numel = pred.size
    # int32 flat-index masking inside the kernel (leave slack for one block).
    assert 0 < numel < 2**31 - 2**22

    itemsize = jnp.dtype(pred.dtype).itemsize
    sub = {4: 8, 2: 16, 1: 32}.get(itemsize, 8)          # sublane tile multiple
    cap = max(sub, (_TILE_BYTES // (_LANE * itemsize)) // sub * sub)

    p = pred.reshape(-1)
    t = target.reshape(-1)

    rows = pl.cdiv(numel, _LANE)
    rows_alloc = max(rows, sub)
    pad = rows_alloc * _LANE - numel
    if pad:
        # Only hit for lane-unaligned numel or tiny (< sub rows) inputs; padded
        # elements are masked out in-kernel, so there is no reliance on
        # loss(0) == 0.  Lane-aligned inputs never pay this copy.
        # TODO(synk): a fully copy-free unaligned path would need a manual-DMA
        # (pl.ANY) tail; not worth it for a <128-element remainder.
        p = jnp.pad(p, (0, pad))
        t = jnp.pad(t, (0, pad))

    p2 = p.reshape(rows_alloc, _LANE)
    t2 = t.reshape(rows_alloc, _LANE)

    # Block rows: multiple of the dtype's sublane tile, capped at ~1 MiB/tile.
    br = min(cap, (rows_alloc // sub) * sub)
    num_blocks = pl.cdiv(rows_alloc, br)
    ncores = min(_tensorcores_per_chip(), num_blocks)    # 1 on v5e/v6e
    bpc = pl.cdiv(num_blocks, ncores)                    # row-blocks per core
    full_blocks = numel // (br * _LANE)                  # blocks with no ragged tail
    has_partial = full_blocks < ncores * bpc             # any block needs masking?

    def in_map(c, i):
        # Clamp out-of-range logical blocks (odd block counts on dual-TC chips)
        # onto the last valid block; their contribution is masked to zero.
        return (jnp.minimum(c * bpc + i, num_blocks - 1), 0)

    cost = pl.CostEstimate(
        flops=6 * numel,
        transcendentals=numel,
        bytes_accessed=2 * numel * itemsize + ncores * 8 * _LANE * 4,
    )

    partials = pl.pallas_call(
        functools.partial(_wing_loss_kernel, bpc=bpc, br=br,
                          full_blocks=full_blocks, numel=numel,
                          has_partial=has_partial),
        out_shape=jax.ShapeDtypeStruct((ncores * 8, _LANE), jnp.float32),
        grid_spec=pltpu.PrefetchScalarGridSpec(
            num_scalar_prefetch=0,
            grid=(ncores, bpc),
            in_specs=[
                pl.BlockSpec((br, _LANE), in_map),
                pl.BlockSpec((br, _LANE), in_map),
            ],
            # Per-core (8,128) accumulator stays resident across the reduction
            # axis; only 4 KiB/core is written back to HBM.
            out_specs=pl.BlockSpec((8, _LANE), lambda c, i: (c, 0)),
        ),
        compiler_params=pltpu.CompilerParams(
            dimension_semantics=("parallel", "arbitrary"),
        ),
        cost_estimate=cost,
    )(p2, t2)

    # Tiny final reduce of the lane-parallel partial sums (ncores * 8 * 128 f32).
    return (jnp.sum(partials) / jnp.float32(numel)).astype(jnp.float32)


def _wing_loss_ref(pred, target):
    d = jnp.abs(target.astype(jnp.float32) - pred.astype(jnp.float32))
    loss = jnp.where(d < OMEGA, OMEGA * jnp.log(1.0 + d / EPSILON), d - _C)
    return jnp.sum(loss) / jnp.float32(pred.size)


def _check(out, ref):
    assert jnp.allclose(out, ref, rtol=5e-5, atol=1e-6), (out, ref)


if __name__ == "__main__":
    key = jax.random.PRNGKey(0)
    keys = jax.random.split(key, 10)

    # 1) Typical small input, lane-aligned (2*4*16*16 = 2048 elements), f32.
    pred = jax.random.normal(keys[0], (2, 4, 16, 16), dtype=jnp.float32) * 8.0
    target = jax.random.normal(keys[1], (2, 4, 16, 16), dtype=jnp.float32) * 8.0
    out = wing_loss(pred, target)
    jax.block_until_ready(out)
    _check(out, _wing_loss_ref(pred, target))

    # 2) Multi-block case exercising the capped block rows and the ragged
    #    trailing row-block (4*8*96*96 = 294912 elements = 2304 rows, no pad).
    pred_b = jax.random.normal(keys[2], (4, 8, 96, 96), dtype=jnp.float32) * 8.0
    target_b = jax.random.normal(keys[3], (4, 8, 96, 96), dtype=jnp.float32) * 8.0
    out_b = wing_loss(pred_b, target_b)
    jax.block_until_ready(out_b)
    _check(out_b, _wing_loss_ref(pred_b, target_b))

    # 3) Tiny non-lane-aligned element count (231) exercising the padded path.
    pred_c = jax.random.normal(keys[4], (3, 7, 11), dtype=jnp.float32) * 8.0
    target_c = jax.random.normal(keys[5], (3, 7, 11), dtype=jnp.float32) * 8.0
    out_c = wing_loss(pred_c, target_c)
    jax.block_until_ready(out_c)
    _check(out_c, _wing_loss_ref(pred_c, target_c))

    # 4) Unaligned + multi-block + partial trailing block (5*7*41 = 1435 elems).
    pred_d = jax.random.normal(keys[6], (5, 7, 41), dtype=jnp.float32) * 8.0
    target_d = jax.random.normal(keys[7], (5, 7, 41), dtype=jnp.float32) * 8.0
    out_d = wing_loss(pred_d, target_d)
    jax.block_until_ready(out_d)
    _check(out_d, _wing_loss_ref(pred_d, target_d))

    # 5) bfloat16 inputs exercising the dtype-scaled sublane tiling / block cap.
    pred_e = (jax.random.normal(keys[8], (2, 4, 16, 16)) * 8.0).astype(jnp.bfloat16)
    target_e = (jax.random.normal(keys[9], (2, 4, 16, 16)) * 8.0).astype(jnp.bfloat16)
    out_e = wing_loss(pred_e, target_e)
    jax.block_until_ready(out_e)
    _check(out_e, _wing_loss_ref(pred_e, target_e))

    print("KERNEL_OK")
</pallas_src>

<mosaic_0001>
module attributes {stable_mosaic.version = 11 : i64} {
  func.func @_wing_loss_kernel(%arg0: i32, %arg1: i32, %arg2: memref<16x128xf32, #tpu.memory_space<vmem>>, %arg3: memref<16x128xf32, #tpu.memory_space<vmem>>, %arg4: memref<8x128xf32, #tpu.memory_space<vmem>>) attributes {dimension_semantics = [#tpu.dimension_semantics<parallel>, #tpu.dimension_semantics<arbitrary>], iteration_bounds = array<i64: 1, 1>, scalar_prefetch = 0 : i64, scratch_operands = 0 : i64, tpu.core_type = #tpu.core_type<tc>, window_params = [{transform_indices = @transform_0, window_bounds = array<i64: 16, 128>}, {transform_indices = @transform_1, window_bounds = array<i64: 16, 128>}, {transform_indices = @transform_2, window_bounds = array<i64: 8, 128>}]} {
    %c0_i32 = arith.constant 0 : i32
    %0 = arith.cmpi eq, %arg1, %c0_i32 : i32
    %1 = arith.extui %0 : i1 to i32
    %c0_i32_0 = arith.constant 0 : i32
    %2 = arith.cmpi ne, %1, %c0_i32_0 : i32
    scf.if %2 {
      %cst_12 = arith.constant 0.000000e+00 : f32
      %22 = vector.broadcast %cst_12 : f32 to vector<8x128xf32>
      %c0_13 = arith.constant 0 : index
      %c0_14 = arith.constant 0 : index
      %23 = vector.load %arg4[%c0_13, %c0_14] : memref<8x128xf32, #tpu.memory_space<vmem>>, vector<8x128xf32>
      tpu.vector_store %arg4[%c0_13, %c0_14], %22 {strides = array<i32>} : memref<8x128xf32, #tpu.memory_space<vmem>>, vector<8x128xf32>,
    } else {
    }
    %c0 = arith.constant 0 : index
    %c0_1 = arith.constant 0 : index
    %3 = vector.load %arg2[%c0, %c0_1] : memref<16x128xf32, #tpu.memory_space<vmem>>, vector<16x128xf32>
    %c0_2 = arith.constant 0 : index
    %c0_3 = arith.constant 0 : index
    %4 = vector.load %arg3[%c0_2, %c0_3] : memref<16x128xf32, #tpu.memory_space<vmem>>, vector<16x128xf32>
    %5 = arith.subf %4, %3 : vector<16x128xf32>
    %6 = math.absf %5 : vector<16x128xf32>
    %cst = arith.constant 1.000000e+01 : f32
    %7 = vector.broadcast %cst : f32 to vector<16x128xf32>
    %8 = arith.cmpf olt, %6, %7 : vector<16x128xf32>
    %cst_4 = arith.constant 5.000000e-01 : f32
    %9 = vector.broadcast %cst_4 : f32 to vector<16x128xf32>
    %10 = arith.mulf %6, %9 : vector<16x128xf32>
    %11 = math.log1p %10 : vector<16x128xf32>
    %cst_5 = arith.constant 1.000000e+01 : f32
    %12 = vector.broadcast %cst_5 : f32 to vector<16x128xf32>
    %13 = arith.mulf %12, %11 : vector<16x128xf32>
    %cst_6 = arith.constant -7.9175949 : f32
    %14 = vector.broadcast %cst_6 : f32 to vector<16x128xf32>
    %15 = arith.subf %6, %14 : vector<16x128xf32>
    %16 = arith.select %8, %13, %15 : vector<16x128xi1>, vector<16x128xf32>
    %c0_7 = arith.constant 0 : index
    %c0_8 = arith.constant 0 : index
    %17 = vector.load %arg4[%c0_7, %c0_8] : memref<8x128xf32, #tpu.memory_space<vmem>>, vector<8x128xf32>
    %18 = vector.shape_cast %16 : vector<16x128xf32> to vector<2x8x128xf32>
    %cst_9 = arith.constant dense<0.000000e+00> : vector<8x128xf32>
    %19 = vector.multi_reduction <add>, %18, %cst_9 [0] : vector<2x8x128xf32> to vector<8x128xf32>
    %20 = arith.addf %17, %19 : vector<8x128xf32>
    %c0_10 = arith.constant 0 : index
    %c0_11 = arith.constant 0 : index
    %21 = vector.load %arg4[%c0_10, %c0_11] : memref<8x128xf32, #tpu.memory_space<vmem>>, vector<8x128xf32>
    tpu.vector_store %arg4[%c0_10, %c0_11], %20 {strides = array<i32>} : memref<8x128xf32, #tpu.memory_space<vmem>>, vector<8x128xf32>,
    return
  }
  func.func @transform_0(%arg0: i32, %arg1: i32) -> (i32, i32) {
    %c1_i32 = arith.constant 1 : i32
    %0 = arith.muli %arg0, %c1_i32 : i32
    %1 = arith.addi %0, %arg1 : i32
    %c0_i32 = arith.constant 0 : i32
    %2 = arith.minsi %1, %c0_i32 : i32
    %c0_i32_0 = arith.constant 0 : i32
    %c0_i32_1 = arith.constant 0 : i32
    return %2, %c0_i32_0 : i32, i32
  }
  func.func @transform_1(%arg0: i32, %arg1: i32) -> (i32, i32) {
    %c1_i32 = arith.constant 1 : i32
    %0 = arith.muli %arg0, %c1_i32 : i32
    %1 = arith.addi %0, %arg1 : i32
    %c0_i32 = arith.constant 0 : i32
    %2 = arith.minsi %1, %c0_i32 : i32
    %c0_i32_0 = arith.constant 0 : i32
    %c0_i32_1 = arith.constant 0 : i32
    return %2, %c0_i32_0 : i32, i32
  }
  func.func @transform_2(%arg0: i32, %arg1: i32) -> (i32, i32) {
    %c0_i32 = arith.constant 0 : i32
    %c0_i32_0 = arith.constant 0 : i32
    return %arg0, %c0_i32 : i32, i32
  }
}

</mosaic_0001>

<llo_original>
// kernel: tpu_custom_call.1
$region0: #{tpu_custom_call.1}
  #allocation0 [shape = 'u32[]', space=smem, size = 0x4, offset = 0x4, fixed_abs, tag = 'smem constant byte address 0x4 - core index']
  #allocation1 [shape = 'u32[72,128]{1,0:T(1,128)}', space=vmem, size = 0x9000, scoped, tag = 'internal scratch']
  %s0 = inlined_call_operand.hbm [shape: f32[16,128], index: 0, kind: input, shape index: {}]
  %s1 = inlined_call_operand.hbm [shape: f32[16,128], index: 1, kind: input, shape index: {}]
  %s2 = inlined_call_operand.hbm [shape: f32[8,128], index: 2, kind: output, shape index: {}]
  %s3 = sld [smem:[#allocation0]]
  $region30: #{tpu_custom_call.1} parent=0
    _
  %s5 = ssub.s32 1, %s3
  %s6 = scalar_select 0, %s5, %s3
  $region1: #{tpu_custom_call.1} parent=0
    #allocation2 [shape = 'u8[8192]{0}', space=vmem, size = 0x2000, scoped, tag = 'input window, operand 0, single buffered']
    #allocation3 [shape = 's32[1]{0}', space=sflag, size = 0x4, scoped, tag = 'scoped memory for tpu_custom_call.1']
    #allocation4 [shape = 's32[1]{0}', space=sflag, size = 0x4, scoped, tag = 'scoped memory for tpu_custom_call.1']
    #allocation5 [shape = 'u8[8192]{0}', space=vmem, size = 0x2000, scoped, tag = 'input window, operand 1, single buffered']
    #allocation6 [shape = 's32[1]{0}', space=sflag, size = 0x4, scoped, tag = 'scoped memory for tpu_custom_call.1']
    #allocation7 [shape = 'u8[4096]{0}', space=vmem, size = 0x1000, scoped, tag = 'output window, operand 0, single buffered']
    %7 = vsyncpa [#allocation3], 0
    %8 = vsyncpa [#allocation6], 0
    %9 = vsyncpa [#allocation4], 0
    // Predicated region
    $region2: #{tpu_custom_call.1} parent=1 // pred_check
      _
    $region3: #{tpu_custom_call.1} parent=1 // pred_check_branch
      %11 = sbr.rel (0) target = $region5
    $region4: #{tpu_custom_call.1} parent=1 // pred_region
      %s12 = sadd.s32 0, 0
      %p13 = scmp.lt.s32.totalorder %s12, 0
      %s14 = scalar_select %p13, %s12, 0
      %s15 = smul.u32 2, %s14
      %17 = vsyncadd [#allocation3], 0
      %s18 = smul.addr %s15, 8
      %s19 = scalar_lea.hbm %s0, %s18
      %s20 = sshll.u32 %s19, 4
      %s21 = int_to_ptr.hbm [resolvable:$true] %s20
      %s22 = sshll.u32 [#allocation2], 4
      %s23 = int_to_ptr.vmem [resolvable:$true] %s22
      %28 = dma.hbm_to_vmem [thread:$0]  %s21, 256, %s23, [#allocation3], 128, 128, 8
    $region5: #{tpu_custom_call.1} parent=1 // pred_fallthru
      _
    // Predicated region
    $region6: #{tpu_custom_call.1} parent=1 // pred_check
      _
    $region7: #{tpu_custom_call.1} parent=1 // pred_check_branch
      %30 = sbr.rel (0) target = $region9
    $region8: #{tpu_custom_call.1} parent=1 // pred_region
      %s31 = sadd.s32 0, 0
      %p32 = scmp.lt.s32.totalorder %s31, 0
      %s33 = scalar_select %p32, %s31, 0
      %s34 = smul.u32 2, %s33
      %36 = vsyncadd [#allocation6], 0
      %s37 = smul.addr %s34, 8
      %s38 = scalar_lea.hbm %s1, %s37
      %s39 = sshll.u32 %s38, 4
      %s40 = int_to_ptr.hbm [resolvable:$true] %s39
      %s41 = sshll.u32 [#allocation5], 4
      %s42 = int_to_ptr.vmem [resolvable:$true] %s41
      %47 = dma.hbm_to_vmem [thread:$0]  %s40, 256, %s42, [#allocation6], 128, 128, 8
    $region9: #{tpu_custom_call.1} parent=1 // pred_fallthru
      _
    // Predicated region
    $region10: #{tpu_custom_call.1} parent=1 // pred_check
      _
    $region11: #{tpu_custom_call.1} parent=1 // pred_check_branch
      %49 = sbr.rel (0) target = $region13
    $region12: #{tpu_custom_call.1} parent=1 // pred_region
      %51 = dma.done [#allocation3], 256
    $region13: #{tpu_custom_call.1} parent=1 // pred_fallthru
      _
    // Predicated region
    $region14: #{tpu_custom_call.1} parent=1 // pred_check
      _
    $region15: #{tpu_custom_call.1} parent=1 // pred_check_branch
      %53 = sbr.rel (0) target = $region17
    $region16: #{tpu_custom_call.1} parent=1 // pred_region
      %55 = dma.done [#allocation6], 256
    $region17: #{tpu_custom_call.1} parent=1 // pred_fallthru
      _
    %s56 = sadd.s32 0, 0
    %p57 = scmp.lt.s32.totalorder %s56, 0
    %s58 = scalar_select %p57, %s56, 0
    %s59 = smul.u32 2, %s58
    %s60 = sadd.s32 0, 0
    %p61 = scmp.lt.s32.totalorder %s60, 0
    %s62 = scalar_select %p61, %s60, 0
    %s63 = smul.u32 2, %s62
    %p64 = scmp.eq.s32.totalorder 0, 0
    // Predicated region
    $region18: #{tpu_custom_call.1} parent=1 // pred_check
      %p65 = pneg %p64
    $region19: #{tpu_custom_call.1} parent=1 // pred_check_branch
      %67 = sbr.rel (%p65) target = $region21
    $region20: #{tpu_custom_call.1} parent=1 // pred_region
      %68 = vst [vmem:[#allocation7] sm:$0xff] 0.0
    $region21: #{tpu_custom_call.1} parent=1 // pred_fallthru
      _
    %v69 = vld [vmem:[#allocation2] sm:$0xff]
    %v70 = vld [vmem:[#allocation2 + $0x8] sm:$0xff]
    %v71 = vld [vmem:[#allocation5] sm:$0xff]
    %v72 = vld [vmem:[#allocation5 + $0x8] sm:$0xff]
    %v73 = vsub.f32 %v71, %v69
    %v74 = vsub.f32 %v72, %v70
    %v75 = vand.u32 2147483647, %v73
    %v76 = vand.u32 2147483647, %v74
    %vm77 = vcmp.lt.f32.partialorder %v75, 10.0
    %vm78 = vcmp.lt.f32.partialorder %v76, 10.0
    %v79 = vmul.f32 %v75, 0.5
    %v80 = vmul.f32 %v76, 0.5
    %v81 = vadd.f32 %v79, 1.0
    %v82 = vlog2.pop %v81
    %v83 = vmul.f32 %v82, 0.6931472
    %v84 = vmul.f32 -0.5, %v79
    %v85 = vadd.f32 %v84, 1.0
    %v86 = vmul.f32 %v85, %v79
    %v87 = vand.u32 2147483647, %v79
    %vm88 = vcmp.lt.f32.partialorder %v87, 0.0004427343
    %v89 = vsel %vm88, %v86, %v83
    %v90 = vadd.f32 %v80, 1.0
    %v91 = vlog2.pop %v90
    %v92 = vmul.f32 %v91, 0.6931472
    %v93 = vmul.f32 -0.5, %v80
    %v94 = vadd.f32 %v93, 1.0
    %v95 = vmul.f32 %v94, %v80
    %v96 = vand.u32 2147483647, %v80
    %vm97 = vcmp.lt.f32.partialorder %v96, 0.0004427343
    %v98 = vsel %vm97, %v95, %v92
    %v99 = vmul.f32 %v89, 10.0
    %v100 = vmul.f32 %v98, 10.0
    %v101 = vsub.f32 %v75, -7.917595
    %v102 = vsub.f32 %v76, -7.917595
    %v103 = vsel %vm77, %v99, %v101
    %v104 = vsel %vm78, %v100, %v102
    %v105 = vld [vmem:[#allocation7] sm:$0xff]
    %v106 = vadd.f32 %v103, %v104
    %v107 = vadd.f32 %v105, %v106
    %108 = vst [vmem:[#allocation7] sm:$0xff] %v107
    // Predicated region
    $region22: #{tpu_custom_call.1} parent=1 // pred_check
      _
    $region23: #{tpu_custom_call.1} parent=1 // pred_check_branch
      %110 = sbr.rel (0) target = $region25
    $region24: #{tpu_custom_call.1} parent=1 // pred_region
      %112 = vsyncadd [#allocation4], 0
      %s114 = sshll.u32 [#allocation7], 4
      %s115 = int_to_ptr.vmem [resolvable:$true] %s114
      %s116 = sshll.u32 %s2, 4
      %s117 = int_to_ptr.hbm [resolvable:$true] %s116
      %119 = dma.vmem_to_hbm [thread:$0]  %s115, 128, %s117, [#allocation4]
    $region25: #{tpu_custom_call.1} parent=1 // pred_fallthru
      _
    // Predicated region
    $region26: #{tpu_custom_call.1} parent=1 // pred_check
      _
    $region27: #{tpu_custom_call.1} parent=1 // pred_check_branch
      %121 = sbr.rel (0) target = $region29
    $region28: #{tpu_custom_call.1} parent=1 // pred_region
      %123 = dma.done [#allocation4], 128
    $region29: #{tpu_custom_call.1} parent=1 // pred_fallthru
      _
    %124 = vsyncpa [#allocation3], 1
    %125 = vsyncpa [#allocation6], 1
    %126 = vsyncpa [#allocation4], 1

</llo_original>
